<compile_context>
chip_gen: v7x
topology: tpu7x:2x2x1
jax: 0.10.0
libtpu: 0.0.40
codegen_flags: <defaults>
</compile_context>

<pallas_src>
import math
from functools import partial

import jax
import jax.numpy as jnp
from jax.experimental import pallas as pl
from jax.experimental.pallas import tpu as pltpu


def _round_up(x: int, m: int) -> int:
    return (x + m - 1) // m * m


def _rnn_cell_kernel(xh_ref, w_in_ref, b_hh_ref, w_hy_ref, b_hy_ref,
                     h_new_ref, y_ref):
    # xh_ref   : (Bb, Kp)  bf16   [x | h] concatenated, zero-padded on K
    # w_in_ref : (Kp, Np)  bf16   [W_xh ; W_hh] stacked, (in, out) layout
    # b_hh_ref : (1,  Np)  f32
    # w_hy_ref : (Np, Mp)  bf16
    # b_hy_ref : (1,  Mp)  f32
    # h_new_ref: (Bb, Np)  f32    lane-dense output
    # y_ref    : (Bb, Mp)  f32    lane-dense output

    # Single fused MXU matmul for the pre-activation (K = k_in + k_state).
    pre = jnp.dot(xh_ref[...], w_in_ref[...],
                  preferred_element_type=jnp.float32)
    pre += b_hh_ref[...]                      # broadcast over batch (f32 VPU)
    h_new = jnp.tanh(pre)                     # f32 EUP path

    # Output projection; MXU operands in bf16, f32 accumulation.
    y = jnp.dot(h_new.astype(w_hy_ref.dtype), w_hy_ref[...],
                preferred_element_type=jnp.float32)
    y += b_hy_ref[...]

    h_new_ref[...] = h_new.astype(h_new_ref.dtype)
    y_ref[...] = y.astype(y_ref.dtype)


def prepare_params(params, *, compute_dtype=jnp.bfloat16):
    """One-time weight prep (transpose / stack / pad / cast).

    Hoisted out of the per-step path so a recurrent driver pays this cost once
    instead of emitting transposes + HBM weight copies on every call.
    """
    W_xh = params["W_xh"]          # (k_state, k_in)   PyTorch layout
    W_hh = params["W_hh"]          # (k_state, k_state)
    b_hh = params["b_hh"]          # (k_state,)
    W_hy = params["W_hy"]          # (k_out, k_state)
    b_hy = params["b_hy"]          # (k_out,)

    k_state, k_in = W_xh.shape
    k_out = W_hy.shape[0]

    K = k_in + k_state
    Kp = _round_up(K, 128)
    Np = _round_up(k_state, 128)
    Mp = _round_up(k_out, 128)

    # Stack on the reduction axis, (in, out) layout; zero-pad to lane-dense.
    w_in = jnp.concatenate([W_xh.T, W_hh.T], axis=0)        # (K, k_state)
    w_in = jnp.pad(w_in, ((0, Kp - K), (0, Np - k_state)))
    w_hy = jnp.pad(W_hy.T, ((0, Np - k_state), (0, Mp - k_out)))

    return {
        "w_in": w_in.astype(compute_dtype),
        "b_hh": jnp.pad(b_hh, (0, Np - k_state)).reshape(1, Np)
                   .astype(jnp.float32),
        "w_hy": w_hy.astype(compute_dtype),
        "b_hy": jnp.pad(b_hy, (0, Mp - k_out)).reshape(1, Mp)
                   .astype(jnp.float32),
    }


@partial(jax.jit, static_argnames=("k_out",))
def rnn_cell_forward(x, state, prepared, *, k_out):
    """Fused RNNCell step. Returns (y_new (B,k_out), state_new (B,k_state))."""
    B, k_in = x.shape
    k_state = state.shape[1]
    w_in, b_hh = prepared["w_in"], prepared["b_hh"]
    w_hy, b_hy = prepared["w_hy"], prepared["b_hy"]
    Kp, Np = w_in.shape
    Mp = w_hy.shape[1]
    K = k_in + k_state

    # Lane/sublane-dense padding + batch tiling (parallel grid axis -> v7x
    # megacore sharding for large batches; trivial grid=(1,) at small B).
    Bp = _round_up(B, 8)
    Bb = min(Bp, 128)
    Bp = _round_up(Bp, Bb)

    xh = jnp.concatenate([x, state], axis=1)                  # (B, K)
    xh = jnp.pad(xh, ((0, Bp - B), (0, Kp - K))).astype(w_in.dtype)

    h_pad, y_pad = pl.pallas_call(
        _rnn_cell_kernel,
        out_shape=(
            jax.ShapeDtypeStruct((Bp, Np), jnp.float32),
            jax.ShapeDtypeStruct((Bp, Mp), jnp.float32),
        ),
        grid=(Bp // Bb,),
        in_specs=[
            pl.BlockSpec((Bb, Kp), lambda i: (i, 0)),   # activations: batch-tiled
            pl.BlockSpec((Kp, Np), lambda i: (0, 0)),   # weights: resident
            pl.BlockSpec((1, Np), lambda i: (0, 0)),
            pl.BlockSpec((Np, Mp), lambda i: (0, 0)),
            pl.BlockSpec((1, Mp), lambda i: (0, 0)),
        ],
        out_specs=(
            pl.BlockSpec((Bb, Np), lambda i: (i, 0)),
            pl.BlockSpec((Bb, Mp), lambda i: (i, 0)),
        ),
        compiler_params=pltpu.CompilerParams(
            dimension_semantics=("parallel",)),
    )(xh, w_in, b_hh, w_hy, b_hy)

    y_new = y_pad[:B, :k_out]
    state_new = h_pad[:B, :k_state]
    return y_new, state_new


def init_params(key, k_in, k_state, k_out):
    """Deterministic init matching RNNCell.init_param: N(0, 1/sqrt(k_state))."""
    stdv = 1.0 / math.sqrt(k_state)
    k1, k2, k3, k4, k5 = jax.random.split(key, 5)
    return {
        "W_xh": stdv * jax.random.normal(k1, (k_state, k_in), jnp.float32),
        "W_hh": stdv * jax.random.normal(k2, (k_state, k_state), jnp.float32),
        "b_hh": stdv * jax.random.normal(k3, (k_state,), jnp.float32),
        "W_hy": stdv * jax.random.normal(k4, (k_out, k_state), jnp.float32),
        "b_hy": stdv * jax.random.normal(k5, (k_out,), jnp.float32),
    }


def _reference_f32(x, state, p):
    h_new = jnp.tanh(x @ p["W_xh"].T + state @ p["W_hh"].T + p["b_hh"])
    y_new = h_new @ p["W_hy"].T + p["b_hy"]
    return y_new, h_new


def _reference_bf16(x, state, p):
    # Same math with operands quantized to bf16 (what the kernel feeds the MXU)
    # and fp32 accumulation — isolates the bf16-input quantization effect.
    bf16 = jnp.bfloat16
    pre = jnp.dot(x.astype(bf16), p["W_xh"].T.astype(bf16),
                  preferred_element_type=jnp.float32)
    pre += jnp.dot(state.astype(bf16), p["W_hh"].T.astype(bf16),
                   preferred_element_type=jnp.float32)
    h_new = jnp.tanh(pre + p["b_hh"])
    y_new = jnp.dot(h_new.astype(bf16), p["W_hy"].T.astype(bf16),
                    preferred_element_type=jnp.float32) + p["b_hy"]
    return y_new, h_new


if __name__ == "__main__":
    B, k_in, k_state, k_out = 8, 32, 32, 16

    key = jax.random.PRNGKey(0)
    kx, kh, kp = jax.random.split(key, 3)
    x = jax.random.normal(kx, (B, k_in), jnp.float32)
    state = jax.random.normal(kh, (B, k_state), jnp.float32)
    params = init_params(kp, k_in, k_state, k_out)

    prepared = prepare_params(params)                    # one-time weight prep
    y_new, state_new = rnn_cell_forward(x, state, prepared, k_out=k_out)
    jax.block_until_ready((y_new, state_new))

    assert y_new.shape == (B, k_out) and state_new.shape == (B, k_state)

    # Full-fp32 PyTorch semantics (bf16 MXU inputs => loose tolerance).
    y_f32, h_f32 = _reference_f32(x, state, params)
    assert jnp.allclose(y_new, y_f32, atol=5e-2, rtol=5e-2)
    assert jnp.allclose(state_new, h_f32, atol=5e-2, rtol=5e-2)

    # bf16-operand reference (same quantization as the kernel) => tight match.
    y_bf, h_bf = _reference_bf16(x, state, params)
    assert jnp.allclose(y_new, y_bf, atol=5e-3, rtol=5e-3)
    assert jnp.allclose(state_new, h_bf, atol=5e-3, rtol=5e-3)

    print("KERNEL_OK")
</pallas_src>

<mosaic_0001>
module attributes {stable_mosaic.version = 11 : i64} {
  func.func @_rnn_cell_kernel(%arg0: i32, %arg1: memref<8x128xbf16, #tpu.memory_space<vmem>>, %arg2: memref<128x128xbf16, #tpu.memory_space<vmem>>, %arg3: memref<1x128xf32, #tpu.memory_space<vmem>>, %arg4: memref<128x128xbf16, #tpu.memory_space<vmem>>, %arg5: memref<1x128xf32, #tpu.memory_space<vmem>>, %arg6: memref<8x128xf32, #tpu.memory_space<vmem>>, %arg7: memref<8x128xf32, #tpu.memory_space<vmem>>) attributes {dimension_semantics = [#tpu.dimension_semantics<parallel>], iteration_bounds = array<i64: 1>, scalar_prefetch = 0 : i64, scratch_operands = 0 : i64, tpu.core_type = #tpu.core_type<tc>, window_params = [{transform_indices = @transform_0, window_bounds = array<i64: 8, 128>}, {pipeline_mode = #tpu.pipeline_mode<synchronous>, transform_indices = @transform_1, window_bounds = array<i64: 128, 128>}, {pipeline_mode = #tpu.pipeline_mode<synchronous>, transform_indices = @transform_2, window_bounds = array<i64: 1, 128>}, {pipeline_mode = #tpu.pipeline_mode<synchronous>, transform_indices = @transform_3, window_bounds = array<i64: 128, 128>}, {pipeline_mode = #tpu.pipeline_mode<synchronous>, transform_indices = @transform_4, window_bounds = array<i64: 1, 128>}, {transform_indices = @transform_5, window_bounds = array<i64: 8, 128>}, {transform_indices = @transform_6, window_bounds = array<i64: 8, 128>}]} {
    %c0 = arith.constant 0 : index
    %c0_0 = arith.constant 0 : index
    %0 = vector.load %arg1[%c0, %c0_0] : memref<8x128xbf16, #tpu.memory_space<vmem>>, vector<8x128xbf16>
    %c0_1 = arith.constant 0 : index
    %c0_2 = arith.constant 0 : index
    %1 = vector.load %arg2[%c0_1, %c0_2] : memref<128x128xbf16, #tpu.memory_space<vmem>>, vector<128x128xbf16>
    %cst = arith.constant dense<0.000000e+00> : vector<8x128xf32>
    %2 = tpu.matmul %0, %1, %cst {dimension_numbers = #tpu.dot_dimension_numbers<[1], [0], [0], [1], [0, 0, 1, 1], [], []>} : vector<8x128xbf16>, vector<128x128xbf16>, vector<8x128xf32> -> vector<8x128xf32>
    %c0_3 = arith.constant 0 : index
    %c0_4 = arith.constant 0 : index
    %3 = vector.load %arg3[%c0_3, %c0_4] : memref<1x128xf32, #tpu.memory_space<vmem>>, vector<1x128xf32>
    %4 = vector.broadcast %3 : vector<1x128xf32> to vector<8x128xf32>
    %5 = arith.addf %2, %4 : vector<8x128xf32>
    %6 = math.tanh %5 : vector<8x128xf32>
    %7 = arith.truncf %6 : vector<8x128xf32> to vector<8x128xbf16>
    %c0_5 = arith.constant 0 : index
    %c0_6 = arith.constant 0 : index
    %8 = vector.load %arg4[%c0_5, %c0_6] : memref<128x128xbf16, #tpu.memory_space<vmem>>, vector<128x128xbf16>
    %cst_7 = arith.constant dense<0.000000e+00> : vector<8x128xf32>
    %9 = tpu.matmul %7, %8, %cst_7 {dimension_numbers = #tpu.dot_dimension_numbers<[1], [0], [0], [1], [0, 0, 1, 1], [], []>} : vector<8x128xbf16>, vector<128x128xbf16>, vector<8x128xf32> -> vector<8x128xf32>
    %c0_8 = arith.constant 0 : index
    %c0_9 = arith.constant 0 : index
    %10 = vector.load %arg5[%c0_8, %c0_9] : memref<1x128xf32, #tpu.memory_space<vmem>>, vector<1x128xf32>
    %11 = vector.broadcast %10 : vector<1x128xf32> to vector<8x128xf32>
    %12 = arith.addf %9, %11 : vector<8x128xf32>
    %c0_10 = arith.constant 0 : index
    %c0_11 = arith.constant 0 : index
    %13 = vector.load %arg6[%c0_10, %c0_11] : memref<8x128xf32, #tpu.memory_space<vmem>>, vector<8x128xf32>
    tpu.vector_store %arg6[%c0_10, %c0_11], %6 {strides = array<i32>} : memref<8x128xf32, #tpu.memory_space<vmem>>, vector<8x128xf32>,
    %c0_12 = arith.constant 0 : index
    %c0_13 = arith.constant 0 : index
    %14 = vector.load %arg7[%c0_12, %c0_13] : memref<8x128xf32, #tpu.memory_space<vmem>>, vector<8x128xf32>
    tpu.vector_store %arg7[%c0_12, %c0_13], %12 {strides = array<i32>} : memref<8x128xf32, #tpu.memory_space<vmem>>, vector<8x128xf32>,
    return
  }
  func.func @transform_0(%arg0: i32) -> (i32, i32) {
    %c0_i32 = arith.constant 0 : i32
    %c0_i32_0 = arith.constant 0 : i32
    return %arg0, %c0_i32 : i32, i32
  }
  func.func @transform_1(%arg0: i32) -> (i32, i32) {
    %c0_i32 = arith.constant 0 : i32
    %c0_i32_0 = arith.constant 0 : i32
    %c0_i32_1 = arith.constant 0 : i32
    return %c0_i32, %c0_i32_0 : i32, i32
  }
  func.func @transform_2(%arg0: i32) -> (i32, i32) {
    %c0_i32 = arith.constant 0 : i32
    %c0_i32_0 = arith.constant 0 : i32
    %c0_i32_1 = arith.constant 0 : i32
    return %c0_i32, %c0_i32_0 : i32, i32
  }
  func.func @transform_3(%arg0: i32) -> (i32, i32) {
    %c0_i32 = arith.constant 0 : i32
    %c0_i32_0 = arith.constant 0 : i32
    %c0_i32_1 = arith.constant 0 : i32
    return %c0_i32, %c0_i32_0 : i32, i32
  }
  func.func @transform_4(%arg0: i32) -> (i32, i32) {
    %c0_i32 = arith.constant 0 : i32
    %c0_i32_0 = arith.constant 0 : i32
    %c0_i32_1 = arith.constant 0 : i32
    return %c0_i32, %c0_i32_0 : i32, i32
  }
  func.func @transform_5(%arg0: i32) -> (i32, i32) {
    %c0_i32 = arith.constant 0 : i32
    %c0_i32_0 = arith.constant 0 : i32
    return %arg0, %c0_i32 : i32, i32
  }
  func.func @transform_6(%arg0: i32) -> (i32, i32) {
    %c0_i32 = arith.constant 0 : i32
    %c0_i32_0 = arith.constant 0 : i32
    return %arg0, %c0_i32 : i32, i32
  }
}

</mosaic_0001>

<llo_original>
// kernel: rnn_cell_forward.1
$region0: #{rnn_cell_forward.1}
  #allocation0 [shape = 'u32[]', space=smem, size = 0x4, offset = 0x4, fixed_abs, tag = 'smem constant byte address 0x4 - core index']
  #allocation1 [shape = 'u32[144,128]{1,0:T(1,128)}', space=vmem, size = 0x12000, scoped, tag = 'internal scratch']
  %s0 = inlined_call_operand.vmem [shape: bf16[8,128], index: 0, kind: input, shape index: {}]
  %s1 = inlined_call_operand.hbm [shape: bf16[128,128], index: 1, kind: input, shape index: {}]
  %s2 = inlined_call_operand.vmem [shape: f32[1,128], index: 2, kind: input, shape index: {}]
  %s3 = inlined_call_operand.hbm [shape: bf16[128,128], index: 3, kind: input, shape index: {}]
  %s4 = inlined_call_operand.vmem [shape: f32[1,128], index: 4, kind: input, shape index: {}]
  %s5 = inlined_call_operand.hbm [shape: f32[8,128], index: 5, kind: output, shape index: {0}]
  %s6 = inlined_call_operand.hbm [shape: f32[8,128], index: 6, kind: output, shape index: {1}]
  %7 = xla_tuple %s5, %s6
  %s8 = sld [smem:[#allocation0]]
  $region46: #{rnn_cell_forward.1} parent=0
    _
  %s10 = ssub.s32 1, %s8
  %s11 = scalar_select 0, %s10, %s8
  $region1: #{rnn_cell_forward.1} parent=0
    #allocation2 [shape = 'u8[32768]{0}', space=vmem, size = 0x8000, scoped, tag = 'input window, operand 1, single buffered']
    #allocation3 [shape = 's32[1]{0}', space=sflag, size = 0x4, scoped, tag = 'scoped memory for rnn_cell_forward.1']
    #allocation4 [shape = 's32[1]{0}', space=sflag, size = 0x4, scoped, tag = 'scoped memory for rnn_cell_forward.1']
    #allocation5 [shape = 'u8[32768]{0}', space=vmem, size = 0x8000, scoped, tag = 'input window, operand 3, single buffered']
    #allocation6 [shape = 's32[1]{0}', space=sflag, size = 0x4, scoped, tag = 'scoped memory for rnn_cell_forward.1']
    #allocation7 [shape = 'u8[4096]{0}', space=vmem, size = 0x1000, scoped, tag = 'output window, operand 0, single buffered']
    #allocation8 [shape = 'u8[4096]{0}', space=vmem, size = 0x1000, scoped, tag = 'output window, operand 1, single buffered']
    #allocation9 [shape = 's32[1]{0}', space=sflag, size = 0x4, scoped, tag = 'scoped memory for rnn_cell_forward.1']
    %12 = vsyncpa [#allocation3], 0
    %13 = vsyncpa [#allocation6], 0
    %14 = vsyncpa [#allocation4], 0
    %15 = vsyncpa [#allocation9], 0
    // Predicated region
    $region2: #{rnn_cell_forward.1} parent=1 // pred_check
      _
    $region3: #{rnn_cell_forward.1} parent=1 // pred_check_branch
      %17 = sbr.rel (0) target = $region5
    $region4: #{rnn_cell_forward.1} parent=1 // pred_region
      _
    $region5: #{rnn_cell_forward.1} parent=1 // pred_fallthru
      _
    // Predicated region
    $region6: #{rnn_cell_forward.1} parent=1 // pred_check
      _
    $region7: #{rnn_cell_forward.1} parent=1 // pred_check_branch
      %19 = sbr.rel (0) target = $region9
    $region8: #{rnn_cell_forward.1} parent=1 // pred_region
      %s21 = ssub.s32 1024, 1024
      %22 = vsyncadd [#allocation3], %s21
      %s23 = sshll.u32 [#allocation2], 4
      %s24 = int_to_ptr.vmem [resolvable:$true] %s23
      %29 = dma.hbm_to_vmem [thread:$0]  %s1, 1024, %s24, [#allocation3], 64, 64, 4
    $region9: #{rnn_cell_forward.1} parent=1 // pred_fallthru
      _
    // Predicated region
    $region10: #{rnn_cell_forward.1} parent=1 // pred_check
      _
    $region11: #{rnn_cell_forward.1} parent=1 // pred_check_branch
      %31 = sbr.rel (0) target = $region13
    $region12: #{rnn_cell_forward.1} parent=1 // pred_region
      _
    $region13: #{rnn_cell_forward.1} parent=1 // pred_fallthru
      _
    // Predicated region
    $region14: #{rnn_cell_forward.1} parent=1 // pred_check
      _
    $region15: #{rnn_cell_forward.1} parent=1 // pred_check_branch
      %33 = sbr.rel (0) target = $region17
    $region16: #{rnn_cell_forward.1} parent=1 // pred_region
      %s35 = ssub.s32 1024, 1024
      %36 = vsyncadd [#allocation6], %s35
      %s37 = sshll.u32 [#allocation5], 4
      %s38 = int_to_ptr.vmem [resolvable:$true] %s37
      %43 = dma.hbm_to_vmem [thread:$0]  %s3, 1024, %s38, [#allocation6], 64, 64, 4
    $region17: #{rnn_cell_forward.1} parent=1 // pred_fallthru
      _
    // Predicated region
    $region18: #{rnn_cell_forward.1} parent=1 // pred_check
      _
    $region19: #{rnn_cell_forward.1} parent=1 // pred_check_branch
      %45 = sbr.rel (0) target = $region21
    $region20: #{rnn_cell_forward.1} parent=1 // pred_region
      _
    $region21: #{rnn_cell_forward.1} parent=1 // pred_fallthru
      _
    // Predicated region
    $region22: #{rnn_cell_forward.1} parent=1 // pred_check
      _
    $region23: #{rnn_cell_forward.1} parent=1 // pred_check_branch
      %47 = sbr.rel (0) target = $region25
    $region24: #{rnn_cell_forward.1} parent=1 // pred_region
      %48 = dma.done [#allocation3], 1024
    $region25: #{rnn_cell_forward.1} parent=1 // pred_fallthru
      _
    // Predicated region
    $region26: #{rnn_cell_forward.1} parent=1 // pred_check
      _
    $region27: #{rnn_cell_forward.1} parent=1 // pred_check_branch
      %50 = sbr.rel (0) target = $region29
    $region28: #{rnn_cell_forward.1} parent=1 // pred_region
      %51 = dma.done [#allocation6], 1024
    $region29: #{rnn_cell_forward.1} parent=1 // pred_fallthru
      _
    %v53 = vld [vmem:[%s0] sm:$0xf]
    %v54 = vld [vmem:[#allocation2] sm:$0xf]
    %v55 = vld [vmem:[#allocation2 + $0x4] sm:$0xf]
    %v56 = vld [vmem:[#allocation2 + $0x8] sm:$0xf]
    %v57 = vld [vmem:[#allocation2 + $0xc] sm:$0xf]
    %v58 = vld [vmem:[#allocation2 + $0x10] sm:$0xf]
    %v59 = vld [vmem:[#allocation2 + $0x14] sm:$0xf]
    %v60 = vld [vmem:[#allocation2 + $0x18] sm:$0xf]
    %v61 = vld [vmem:[#allocation2 + $0x1c] sm:$0xf]
    %v62 = vld [vmem:[#allocation2 + $0x20] sm:$0xf]
    %v63 = vld [vmem:[#allocation2 + $0x24] sm:$0xf]
    %v64 = vld [vmem:[#allocation2 + $0x28] sm:$0xf]
    %v65 = vld [vmem:[#allocation2 + $0x2c] sm:$0xf]
    %v66 = vld [vmem:[#allocation2 + $0x30] sm:$0xf]
    %v67 = vld [vmem:[#allocation2 + $0x34] sm:$0xf]
    %v68 = vld [vmem:[#allocation2 + $0x38] sm:$0xf]
    %v69 = vld [vmem:[#allocation2 + $0x3c] sm:$0xf]
    %v70 = vld [vmem:[%s2] sm:$0x1]
    %v72 = vlaneseq
    %v73 = vshrl.u32 %v72, 7
    %v74 = vsub.s32 0, %v73
    %v75 = vrot.slane %v70, %v74
    %v93 = vunpack.c.l.b16 %v54
    %v94 = vunpack.c.l.b16 %v55
    %v95 = vunpack.c.l.b16 %v56
    %v96 = vunpack.c.l.b16 %v57
    %v97 = vunpack.c.l.b16 %v58
    %v98 = vunpack.c.l.b16 %v59
    %v99 = vunpack.c.l.b16 %v60
    %v100 = vunpack.c.l.b16 %v61
    %v101 = vunpack.c.l.b16 %v62
    %v102 = vunpack.c.l.b16 %v63
    %v103 = vunpack.c.l.b16 %v64
    %v104 = vunpack.c.l.b16 %v65
    %v105 = vunpack.c.l.b16 %v66
    %v106 = vunpack.c.l.b16 %v67
    %v107 = vunpack.c.l.b16 %v68
    %v108 = vunpack.c.l.b16 %v69
    %v109 = vpack.c.b16 %v94, %v93
    %v110 = vpack.c.b16 %v96, %v95
    %v111 = vpack.c.b16 %v98, %v97
    %v112 = vpack.c.b16 %v100, %v99
    %v113 = vpack.c.b16 %v102, %v101
    %v114 = vpack.c.b16 %v104, %v103
    %v115 = vpack.c.b16 %v106, %v105
    %v116 = vpack.c.b16 %v108, %v107
    %125 = vmatprep.subr.bf16.mxu0 0
    %126 = vmatpush1.bf16.msra.mxu0 %v109
    %127 = vmatprep.subr.bf16.mxu0 0
    %128 = vmatpush1.bf16.msra.mxu0 %v110
    %129 = vmatprep.subr.bf16.mxu0 0
    %130 = vmatpush1.bf16.msra.mxu0 %v111
    %131 = vmatprep.subr.bf16.mxu0 0
    %132 = vmatpush1.bf16.msra.mxu0 %v112
    %133 = vmatprep.subr.bf16.mxu0 0
    %134 = vmatpush1.bf16.msra.mxu0 %v113
    %135 = vmatprep.subr.bf16.mxu0 0
    %136 = vmatpush1.bf16.msra.mxu0 %v114
    %137 = vmatprep.subr.bf16.mxu0 0
    %138 = vmatpush1.bf16.msra.mxu0 %v115
    %139 = vmatprep.subr.bf16.mxu0 0
    %140 = vmatpush1.bf16.msra.mxu0 %v116
    %141 = vmatprep.subr.bf16.mxu0 0
    %142 = vmatpush1.bf16.msra.mxu0 0
    %143 = vmatprep.subr.bf16.mxu0 0
    %144 = vmatpush1.bf16.msra.mxu0 0
    %145 = vmatprep.subr.bf16.mxu0 0
    %146 = vmatpush1.bf16.msra.mxu0 0
    %147 = vmatprep.subr.bf16.mxu0 0
    %148 = vmatpush1.bf16.msra.mxu0 0
    %149 = vmatprep.subr.bf16.mxu0 0
    %150 = vmatpush1.bf16.msra.mxu0 0
    %151 = vmatprep.subr.bf16.mxu0 0
    %152 = vmatpush1.bf16.msra.mxu0 0
    %153 = vmatprep.subr.bf16.mxu0 0
    %154 = vmatpush1.bf16.msra.mxu0 0
    %155 = vmatprep.subr.bf16.mxu0 0
    %156 = vmatpush1.bf16.msra.mxu0 0
    %157 = vmatprep.mubr.bf16.mxu0 0
    %158 = vmatmul.mubr.bf16.gmra.mrb[0].mxu0 %v53
    %v159 = vpop.f32.mrb[0].mxu0
    %v160 = vadd.f32 %v75, %v159
    %v161 = vpop.f32.mrb[0].mxu0
    %v162 = vpop.f32.mrb[0].mxu0
    %v163 = vpop.f32.mrb[0].mxu0
    %164 = vdwg.mxu0
    %v165 = vtanh.pop %v160
    %v166 = vpack.c.bf16 %v165, %v165
    %v167 = vld [vmem:[#allocation5] sm:$0xf]
    %v168 = vld [vmem:[#allocation5 + $0x4] sm:$0xf]
    %v169 = vld [vmem:[#allocation5 + $0x8] sm:$0xf]
    %v170 = vld [vmem:[#allocation5 + $0xc] sm:$0xf]
    %v171 = vld [vmem:[#allocation5 + $0x10] sm:$0xf]
    %v172 = vld [vmem:[#allocation5 + $0x14] sm:$0xf]
    %v173 = vld [vmem:[#allocation5 + $0x18] sm:$0xf]
    %v174 = vld [vmem:[#allocation5 + $0x1c] sm:$0xf]
    %v175 = vld [vmem:[#allocation5 + $0x20] sm:$0xf]
    %v176 = vld [vmem:[#allocation5 + $0x24] sm:$0xf]
    %v177 = vld [vmem:[#allocation5 + $0x28] sm:$0xf]
    %v178 = vld [vmem:[#allocation5 + $0x2c] sm:$0xf]
    %v179 = vld [vmem:[#allocation5 + $0x30] sm:$0xf]
    %v180 = vld [vmem:[#allocation5 + $0x34] sm:$0xf]
    %v181 = vld [vmem:[#allocation5 + $0x38] sm:$0xf]
    %v182 = vld [vmem:[#allocation5 + $0x3c] sm:$0xf]
    %v183 = vld [vmem:[%s4] sm:$0x1]
    %v185 = vlaneseq
    %v186 = vshrl.u32 %v185, 7
    %v187 = vsub.s32 0, %v186
    %v188 = vrot.slane %v183, %v187
    %v206 = vunpack.c.l.b16 %v167
    %v207 = vunpack.c.l.b16 %v168
    %v208 = vunpack.c.l.b16 %v169
    %v209 = vunpack.c.l.b16 %v170
    %v210 = vunpack.c.l.b16 %v171
    %v211 = vunpack.c.l.b16 %v172
    %v212 = vunpack.c.l.b16 %v173
    %v213 = vunpack.c.l.b16 %v174
    %v214 = vunpack.c.l.b16 %v175
    %v215 = vunpack.c.l.b16 %v176
    %v216 = vunpack.c.l.b16 %v177
    %v217 = vunpack.c.l.b16 %v178
    %v218 = vunpack.c.l.b16 %v179
    %v219 = vunpack.c.l.b16 %v180
    %v220 = vunpack.c.l.b16 %v181
    %v221 = vunpack.c.l.b16 %v182
    %v222 = vpack.c.b16 %v207, %v206
    %v223 = vpack.c.b16 %v209, %v208
    %v224 = vpack.c.b16 %v211, %v210
    %v225 = vpack.c.b16 %v213, %v212
    %v226 = vpack.c.b16 %v215, %v214
    %v227 = vpack.c.b16 %v217, %v216
    %v228 = vpack.c.b16 %v219, %v218
    %v229 = vpack.c.b16 %v221, %v220
    %238 = vmatprep.subr.bf16.mxu0 0
    %239 = vmatpush1.bf16.msra.mxu0 %v222
    %240 = vmatprep.subr.bf16.mxu0 0
    %241 = vmatpush1.bf16.msra.mxu0 %v223
    %242 = vmatprep.subr.bf16.mxu0 0
    %243 = vmatpush1.bf16.msra.mxu0 %v224
    %244 = vmatprep.subr.bf16.mxu0 0
    %245 = vmatpush1.bf16.msra.mxu0 %v225
    %246 = vmatprep.subr.bf16.mxu0 0
    %247 = vmatpush1.bf16.msra.mxu0 %v226
    %248 = vmatprep.subr.bf16.mxu0 0
    %249 = vmatpush1.bf16.msra.mxu0 %v227
    %250 = vmatprep.subr.bf16.mxu0 0
    %251 = vmatpush1.bf16.msra.mxu0 %v228
    %252 = vmatprep.subr.bf16.mxu0 0
    %253 = vmatpush1.bf16.msra.mxu0 %v229
    %254 = vmatprep.subr.bf16.mxu0 0
    %255 = vmatpush1.bf16.msra.mxu0 0
    %256 = vmatprep.subr.bf16.mxu0 0
    %257 = vmatpush1.bf16.msra.mxu0 0
    %258 = vmatprep.subr.bf16.mxu0 0
    %259 = vmatpush1.bf16.msra.mxu0 0
    %260 = vmatprep.subr.bf16.mxu0 0
    %261 = vmatpush1.bf16.msra.mxu0 0
    %262 = vmatprep.subr.bf16.mxu0 0
    %263 = vmatpush1.bf16.msra.mxu0 0
    %264 = vmatprep.subr.bf16.mxu0 0
    %265 = vmatpush1.bf16.msra.mxu0 0
    %266 = vmatprep.subr.bf16.mxu0 0
    %267 = vmatpush1.bf16.msra.mxu0 0
    %268 = vmatprep.subr.bf16.mxu0 0
    %269 = vmatpush1.bf16.msra.mxu0 0
    %270 = vmatprep.mubr.bf16.mxu0 0
    %271 = vmatmul.mubr.bf16.gmra.mrb[0].mxu0 %v166
    %v272 = vpop.f32.mrb[0].mxu0
    %v273 = vadd.f32 %v188, %v272
    %v274 = vpop.f32.mrb[0].mxu0
    %v275 = vpop.f32.mrb[0].mxu0
    %v276 = vpop.f32.mrb[0].mxu0
    %277 = vdwg.mxu0
    %278 = vst [vmem:[#allocation7] sm:$0xff] %v165
    %279 = vst [vmem:[#allocation8] sm:$0xff] %v273
    // Predicated region
    $region30: #{rnn_cell_forward.1} parent=1 // pred_check
      _
    $region31: #{rnn_cell_forward.1} parent=1 // pred_check_branch
      %281 = sbr.rel (0) target = $region33
    $region32: #{rnn_cell_forward.1} parent=1 // pred_region
      %s283 = ssub.s32 128, 128
      %284 = vsyncadd [#allocation4], %s283
      %s286 = sshll.u32 [#allocation7], 4
      %s287 = int_to_ptr.vmem [resolvable:$true] %s286
      %289 = dma.vmem_to_hbm [thread:$0]  %s287, 128, %s5, [#allocation4]
    $region33: #{rnn_cell_forward.1} parent=1 // pred_fallthru
      _
    // Predicated region
    $region34: #{rnn_cell_forward.1} parent=1 // pred_check
      _
    $region35: #{rnn_cell_forward.1} parent=1 // pred_check_branch
      %291 = sbr.rel (0) target = $region37
    $region36: #{rnn_cell_forward.1} parent=1 // pred_region
      %s293 = ssub.s32 128, 128
      %294 = vsyncadd [#allocation9], %s293
      %s296 = sshll.u32 [#allocation8], 4
      %s297 = int_to_ptr.vmem [resolvable:$true] %s296
      %299 = dma.vmem_to_hbm [thread:$0]  %s297, 128, %s6, [#allocation9]
    $region37: #{rnn_cell_forward.1} parent=1 // pred_fallthru
      _
    // Predicated region
    $region38: #{rnn_cell_forward.1} parent=1 // pred_check
      _
    $region39: #{rnn_cell_forward.1} parent=1 // pred_check_branch
      %301 = sbr.rel (0) target = $region41
    $region40: #{rnn_cell_forward.1} parent=1 // pred_region
      %302 = dma.done [#allocation4], 128
    $region41: #{rnn_cell_forward.1} parent=1 // pred_fallthru
      _
    // Predicated region
    $region42: #{rnn_cell_forward.1} parent=1 // pred_check
      _
    $region43: #{rnn_cell_forward.1} parent=1 // pred_check_branch
      %304 = sbr.rel (0) target = $region45
    $region44: #{rnn_cell_forward.1} parent=1 // pred_region
      %305 = dma.done [#allocation9], 128
    $region45: #{rnn_cell_forward.1} parent=1 // pred_fallthru
      _
    %306 = vsyncpa [#allocation3], 1
    %307 = vsyncpa [#allocation6], 1
    %308 = vsyncpa [#allocation4], 1
    %309 = vsyncpa [#allocation9], 1

</llo_original>
